<compile_context>
chip_gen: v7x
topology: tpu7x:2x2x1
jax: 0.10.0
libtpu: 0.0.40
codegen_flags: <defaults>
</compile_context>

<pallas_src>
import functools

import jax
import jax.numpy as jnp
from jax.experimental import pallas as pl
from jax.experimental.pallas import tpu as pltpu


# ----------------------------- Pallas kernel --------------------------------

def _cmix_kernel(x_ref, xp_ref, mu_ref, wk_ref, wv_ref, o_ref, acc_ref):
    """One (tm, C) row tile x one hidden chunk of width th.

    x_ref, xp_ref : (tm, C) bf16   current / time-shifted activations
    mu_ref        : (1, C)  f32    x_k mix coefficient
    wk_ref        : (C, th) bf16   chunk of key.weight.T
    wv_ref        : (th, C) bf16   chunk of value.weight.T
    o_ref         : (tm, C) f32    output tile (resident across hidden chunks)
    acc_ref       : (tm, C) f32    VMEM accumulator scratch
    """
    j = pl.program_id(1)

    @pl.when(j == 0)
    def _init():
        acc_ref[...] = jnp.zeros_like(acc_ref)

    # Token-shift mix in fp32 on the VPU:  mix = x + (x_prev - x) * x_k
    x = x_ref[...].astype(jnp.float32)
    xp = xp_ref[...].astype(jnp.float32)
    mix = x + (xp - x) * mu_ref[...]

    # First matmul (contract over C) for this hidden chunk, fp32 accumulation.
    h = jnp.dot(mix.astype(jnp.bfloat16), wk_ref[...],
                preferred_element_type=jnp.float32)
    h = jnp.maximum(h, 0.0)
    h = h * h

    # Second matmul: accumulate this chunk's contribution to the output tile.
    acc_ref[...] += jnp.dot(h.astype(jnp.bfloat16), wv_ref[...],
                            preferred_element_type=jnp.float32)

    @pl.when(j == pl.num_programs(1) - 1)
    def _finalize():
        o_ref[...] = acc_ref[...].astype(o_ref.dtype)


def _pick_tile(dim, target, align):
    """Largest divisor of `dim` that is a multiple of `align` and <= target.
    Falls back to the full extent (always legal as a block size)."""
    cap = min(target, dim)
    cand = cap - cap % align
    while cand >= align:
        if dim % cand == 0:
            return cand
        cand -= align
    return dim


def rwkv7_cmix(x, x_k, wk, wv, *, tm=None, th=None):
    """RWKV7CMix forward.

    x   : (B, T, C) float32
    x_k : (C,)      float32 mix coefficient
    wk  : (C, 4C)   = key.weight.T
    wv  : (4C, C)   = value.weight.T
    returns (B, T, C) float32
    """
    B, T, C = x.shape
    H4 = wk.shape[1]
    assert wk.shape == (C, H4) and wv.shape == (H4, C)
    M = B * T

    # Zero-padded time shift along T (nn.ZeroPad2d((0,0,1,-1))).
    x_prev = jnp.concatenate(
        [jnp.zeros((B, 1, C), x.dtype), x[:, :-1, :]], axis=1)

    x2 = x.reshape(M, C).astype(jnp.bfloat16)
    xp2 = x_prev.reshape(M, C).astype(jnp.bfloat16)
    mu = x_k.reshape(1, C).astype(jnp.float32)
    wk_b = wk.astype(jnp.bfloat16)
    wv_b = wv.astype(jnp.bfloat16)

    if tm is None:
        # Big enough for the MXU / HBM roofline, but >=2 tiles when possible
        # so the "parallel" axis can shard across v7x's two TensorCores.
        tm = _pick_tile(M, target=max(8, min(256, M // 2)), align=8)
    if th is None:
        th = _pick_tile(H4, target=512, align=128)
    assert M % tm == 0 and H4 % th == 0

    grid = (M // tm, H4 // th)

    out = pl.pallas_call(
        _cmix_kernel,
        out_shape=jax.ShapeDtypeStruct((M, C), jnp.float32),
        grid_spec=pltpu.PrefetchScalarGridSpec(
            num_scalar_prefetch=0,
            grid=grid,
            in_specs=[
                pl.BlockSpec((tm, C), lambda i, j: (i, 0)),   # x
                pl.BlockSpec((tm, C), lambda i, j: (i, 0)),   # x_prev
                pl.BlockSpec((1, C), lambda i, j: (0, 0)),    # x_k
                pl.BlockSpec((C, th), lambda i, j: (0, j)),   # Wk chunk
                pl.BlockSpec((th, C), lambda i, j: (j, 0)),   # Wv chunk
            ],
            out_specs=pl.BlockSpec((tm, C), lambda i, j: (i, 0)),
            scratch_shapes=[pltpu.VMEM((tm, C), jnp.float32)],
        ),
        compiler_params=pltpu.CompilerParams(
            dimension_semantics=("parallel", "arbitrary")),
    )(x2, xp2, mu, wk_b, wv_b)

    return out.reshape(B, T, C)


def rwkv7_cmix_forward(params, x, *, tm=None, th=None):
    return rwkv7_cmix(x, params["x_k"], params["wk"], params["wv"],
                      tm=tm, th=th)


# ------------------------------ reference -----------------------------------

def cmix_reference(params, x):
    B, T, C = x.shape
    x_prev = jnp.concatenate(
        [jnp.zeros((B, 1, C), x.dtype), x[:, :-1, :]], axis=1)
    xx = x_prev - x
    k = x + xx * params["x_k"]
    k = jnp.maximum(k @ params["wk"], 0.0) ** 2
    return k @ params["wv"]


# --------------------------------- main --------------------------------------

if __name__ == "__main__":
    n_layer, layer_id = 4, 1
    B, T, C = 2, 8, 64
    H4 = 4 * C

    root = jax.random.PRNGKey(0)
    k_wk, k_wv, k_x = jax.random.split(root, 3)

    # x_k init exactly as in the PyTorch module.
    ratio_1_to_almost0 = 1.0 - layer_id / n_layer
    ddd = jnp.arange(C, dtype=jnp.float32) / C
    x_k = 1.0 - ddd ** (ratio_1_to_almost0 ** 4)

    params = dict(
        x_k=x_k,
        # key/value stored transposed (so forward is plain x @ W).
        # PyTorch zero-inits value.weight; we use small random values so the
        # numerical check is non-trivial.
        wk=jax.random.normal(k_wk, (C, H4), jnp.float32) * 0.1,
        wv=jax.random.normal(k_wv, (H4, C), jnp.float32) * 0.1,
    )
    x = jax.random.normal(k_x, (B, T, C), jnp.float32)

    # th=128 forces two hidden chunks at this toy size so the accumulator
    # (pl.when init / finalize) path is exercised.
    fwd = jax.jit(functools.partial(rwkv7_cmix_forward, th=128))
    out = fwd(params, x)
    jax.block_until_ready(out)

    ref = cmix_reference(params, x)
    assert out.shape == (B, T, C)
    assert bool(jnp.all(jnp.isfinite(out)))
    max_err = float(jnp.max(jnp.abs(out - ref)))
    tol = 5e-2 * float(jnp.max(jnp.abs(ref))) + 1e-4
    assert max_err <= tol, f"max_err={max_err} tol={tol}"
    print("KERNEL_OK")
</pallas_src>

<mosaic_0001>
module attributes {stable_mosaic.version = 11 : i64} {
  func.func @_cmix_kernel(%arg0: i32, %arg1: i32, %arg2: memref<8x64xbf16, #tpu.memory_space<vmem>>, %arg3: memref<8x64xbf16, #tpu.memory_space<vmem>>, %arg4: memref<1x64xf32, #tpu.memory_space<vmem>>, %arg5: memref<64x128xbf16, #tpu.memory_space<vmem>>, %arg6: memref<128x64xbf16, #tpu.memory_space<vmem>>, %arg7: memref<8x64xf32, #tpu.memory_space<vmem>>, %arg8: memref<8x64xf32, #tpu.memory_space<vmem>>) attributes {dimension_semantics = [#tpu.dimension_semantics<parallel>, #tpu.dimension_semantics<arbitrary>], iteration_bounds = array<i64: 2, 2>, scalar_prefetch = 0 : i64, scratch_operands = 1 : i64, tpu.core_type = #tpu.core_type<tc>, window_params = [{transform_indices = @transform_0, window_bounds = array<i64: 8, 64>}, {transform_indices = @transform_1, window_bounds = array<i64: 8, 64>}, {pipeline_mode = #tpu.pipeline_mode<synchronous>, transform_indices = @transform_2, window_bounds = array<i64: 1, 64>}, {transform_indices = @transform_3, window_bounds = array<i64: 64, 128>}, {transform_indices = @transform_4, window_bounds = array<i64: 128, 64>}, {transform_indices = @transform_5, window_bounds = array<i64: 8, 64>}]} {
    %c0_i32 = arith.constant 0 : i32
    %0 = arith.cmpi eq, %arg1, %c0_i32 : i32
    %1 = arith.extui %0 : i1 to i32
    %c0_i32_0 = arith.constant 0 : i32
    %2 = arith.cmpi ne, %1, %c0_i32_0 : i32
    scf.if %2 {
      %cst_17 = arith.constant 0.000000e+00 : f32
      %27 = vector.broadcast %cst_17 : f32 to vector<8x64xf32>
      %c0_18 = arith.constant 0 : index
      %c0_19 = arith.constant 0 : index
      %28 = vector.load %arg8[%c0_18, %c0_19] : memref<8x64xf32, #tpu.memory_space<vmem>>, vector<8x64xf32>
      tpu.vector_store %arg8[%c0_18, %c0_19], %27 {strides = array<i32>} : memref<8x64xf32, #tpu.memory_space<vmem>>, vector<8x64xf32>,
    } else {
    }
    %c0 = arith.constant 0 : index
    %c0_1 = arith.constant 0 : index
    %3 = vector.load %arg2[%c0, %c0_1] : memref<8x64xbf16, #tpu.memory_space<vmem>>, vector<8x64xbf16>
    %4 = arith.extf %3 : vector<8x64xbf16> to vector<8x64xf32>
    %c0_2 = arith.constant 0 : index
    %c0_3 = arith.constant 0 : index
    %5 = vector.load %arg3[%c0_2, %c0_3] : memref<8x64xbf16, #tpu.memory_space<vmem>>, vector<8x64xbf16>
    %6 = arith.extf %5 : vector<8x64xbf16> to vector<8x64xf32>
    %7 = arith.subf %6, %4 : vector<8x64xf32>
    %c0_4 = arith.constant 0 : index
    %c0_5 = arith.constant 0 : index
    %8 = vector.load %arg4[%c0_4, %c0_5] : memref<1x64xf32, #tpu.memory_space<vmem>>, vector<1x64xf32>
    %9 = vector.broadcast %8 : vector<1x64xf32> to vector<8x64xf32>
    %10 = arith.mulf %7, %9 : vector<8x64xf32>
    %11 = arith.addf %4, %10 : vector<8x64xf32>
    %12 = arith.truncf %11 : vector<8x64xf32> to vector<8x64xbf16>
    %c0_6 = arith.constant 0 : index
    %c0_7 = arith.constant 0 : index
    %13 = vector.load %arg5[%c0_6, %c0_7] : memref<64x128xbf16, #tpu.memory_space<vmem>>, vector<64x128xbf16>
    %cst = arith.constant dense<0.000000e+00> : vector<8x128xf32>
    %14 = tpu.matmul %12, %13, %cst {dimension_numbers = #tpu.dot_dimension_numbers<[1], [0], [0], [1], [0, 0, 1, 1], [], []>} : vector<8x64xbf16>, vector<64x128xbf16>, vector<8x128xf32> -> vector<8x128xf32>
    %cst_8 = arith.constant 0.000000e+00 : f32
    %15 = vector.broadcast %cst_8 : f32 to vector<8x128xf32>
    %16 = arith.maximumf %14, %15 : vector<8x128xf32>
    %17 = arith.mulf %16, %16 : vector<8x128xf32>
    %c0_9 = arith.constant 0 : index
    %c0_10 = arith.constant 0 : index
    %18 = vector.load %arg8[%c0_9, %c0_10] : memref<8x64xf32, #tpu.memory_space<vmem>>, vector<8x64xf32>
    %19 = arith.truncf %17 : vector<8x128xf32> to vector<8x128xbf16>
    %c0_11 = arith.constant 0 : index
    %c0_12 = arith.constant 0 : index
    %20 = vector.load %arg6[%c0_11, %c0_12] : memref<128x64xbf16, #tpu.memory_space<vmem>>, vector<128x64xbf16>
    %cst_13 = arith.constant dense<0.000000e+00> : vector<8x64xf32>
    %21 = tpu.matmul %19, %20, %cst_13 {dimension_numbers = #tpu.dot_dimension_numbers<[1], [0], [0], [1], [0, 0, 1, 1], [], []>} : vector<8x128xbf16>, vector<128x64xbf16>, vector<8x64xf32> -> vector<8x64xf32>
    %22 = arith.addf %18, %21 : vector<8x64xf32>
    %c0_14 = arith.constant 0 : index
    %c0_15 = arith.constant 0 : index
    %23 = vector.load %arg8[%c0_14, %c0_15] : memref<8x64xf32, #tpu.memory_space<vmem>>, vector<8x64xf32>
    tpu.vector_store %arg8[%c0_14, %c0_15], %22 {strides = array<i32>} : memref<8x64xf32, #tpu.memory_space<vmem>>, vector<8x64xf32>,
    %c1_i32 = arith.constant 1 : i32
    %24 = arith.cmpi eq, %arg1, %c1_i32 : i32
    %25 = arith.extui %24 : i1 to i32
    %c0_i32_16 = arith.constant 0 : i32
    %26 = arith.cmpi ne, %25, %c0_i32_16 : i32
    scf.if %26 {
      %c0_17 = arith.constant 0 : index
      %c0_18 = arith.constant 0 : index
      %27 = vector.load %arg8[%c0_17, %c0_18] : memref<8x64xf32, #tpu.memory_space<vmem>>, vector<8x64xf32>
      %c0_19 = arith.constant 0 : index
      %c0_20 = arith.constant 0 : index
      %28 = vector.load %arg7[%c0_19, %c0_20] : memref<8x64xf32, #tpu.memory_space<vmem>>, vector<8x64xf32>
      tpu.vector_store %arg7[%c0_19, %c0_20], %27 {strides = array<i32>} : memref<8x64xf32, #tpu.memory_space<vmem>>, vector<8x64xf32>,
    } else {
    }
    return
  }
  func.func @transform_0(%arg0: i32, %arg1: i32) -> (i32, i32) {
    %c0_i32 = arith.constant 0 : i32
    %c0_i32_0 = arith.constant 0 : i32
    return %arg0, %c0_i32 : i32, i32
  }
  func.func @transform_1(%arg0: i32, %arg1: i32) -> (i32, i32) {
    %c0_i32 = arith.constant 0 : i32
    %c0_i32_0 = arith.constant 0 : i32
    return %arg0, %c0_i32 : i32, i32
  }
  func.func @transform_2(%arg0: i32, %arg1: i32) -> (i32, i32) {
    %c0_i32 = arith.constant 0 : i32
    %c0_i32_0 = arith.constant 0 : i32
    %c0_i32_1 = arith.constant 0 : i32
    return %c0_i32, %c0_i32_0 : i32, i32
  }
  func.func @transform_3(%arg0: i32, %arg1: i32) -> (i32, i32) {
    %c0_i32 = arith.constant 0 : i32
    %c0_i32_0 = arith.constant 0 : i32
    return %c0_i32, %arg1 : i32, i32
  }
  func.func @transform_4(%arg0: i32, %arg1: i32) -> (i32, i32) {
    %c0_i32 = arith.constant 0 : i32
    %c0_i32_0 = arith.constant 0 : i32
    return %arg1, %c0_i32 : i32, i32
  }
  func.func @transform_5(%arg0: i32, %arg1: i32) -> (i32, i32) {
    %c0_i32 = arith.constant 0 : i32
    %c0_i32_0 = arith.constant 0 : i32
    return %arg0, %c0_i32 : i32, i32
  }
}

</mosaic_0001>

<llo_original>
// kernel: rwkv7_cmix_forward.1
$region0: #{rwkv7_cmix_forward.1}
  #allocation0 [shape = 'u32[]', space=smem, size = 0x4, offset = 0x4, fixed_abs, tag = 'smem constant byte address 0x4 - core index']
  #allocation1 [shape = 'u32[144,128]{1,0:T(1,128)}', space=vmem, size = 0x12000, scoped, tag = 'internal scratch']
  #allocation2 [shape = 'f32[8,64]{1,0:T(8,128)}', space=vmem, size = 0x1000, scoped, tag = 'scratch operand']
  %s0 = inlined_call_operand.vmem [shape: bf16[16,64], index: 0, kind: input, shape index: {}]
  %s1 = inlined_call_operand.vmem [shape: bf16[16,64], index: 1, kind: input, shape index: {}]
  %s2 = inlined_call_operand.vmem [shape: f32[1,64], index: 2, kind: input, shape index: {}]
  %s3 = inlined_call_operand.vmem [shape: bf16[64,256], index: 3, kind: input, shape index: {}]
  %s4 = inlined_call_operand.vmem [shape: bf16[256,64], index: 4, kind: input, shape index: {}]
  %s5 = inlined_call_operand.hbm [shape: f32[16,64], index: 5, kind: output, shape index: {}]
  %s6 = sld [smem:[#allocation0]]
  $region102: #{rwkv7_cmix_forward.1} parent=0
    _
  %s8 = ssub.s32 1, %s6
  %s9 = scalar_select 0, %s8, %s6
  $region1: #{rwkv7_cmix_forward.1} parent=0
    #allocation3 [shape = 'u8[32768]{0}', space=vmem, size = 0x8000, scoped, tag = 'input window, operand 3']
    #allocation4 [shape = 'u8[8192]{0}', space=vmem, size = 0x2000, scoped, tag = 'output window, operand 0']
    #allocation5 [shape = 's32[2]{0}', space=sflag, size = 0x8, scoped, tag = 'scoped memory for rwkv7_cmix_forward.1']
    %10 = vsyncpa [#allocation5], 0
    %s11 = scalar_lea.sflag [#allocation5], 1
    %12 = vsyncpa %s11, 0
    loop: start=0, step=1, limit=6
    $region2: #{rwkv7_cmix_forward.1} parent=1 // loop_pre_header
      _
    $region3: #{rwkv7_cmix_forward.1} parent=1 // loop_header
      %s14 = sphi 0, %s18
      %p15 = scmp.ge.s32.totalorder %s14, 6
      %s21 = sphi 0, %s33
      %s22 = sphi 0, %s29
      %s23 = sphi 0, %s21
      %s24 = sphi 0, %s22
      %s25 = sphi 0, %s23
      %s26 = sphi 0, %s24
      %s36 = sphi 0, %s38
      %s39 = sphi 0, %s36
      %s40 = sphi 0, %s39
      %s56 = sphi 0, %s40
      %s62 = sphi 0, %s64
      %s65 = sphi 0, %s62
      %s66 = sphi 0, %s65
      %s82 = sphi 0, %s66
      %s86 = sphi 0, %s86
      %s88 = sphi 0, %s86
      %s89 = sphi 0, %s88
      %s103 = sphi 0, %s89
      %s109 = sphi 0, %s111
      %s112 = sphi 0, %s109
      %s113 = sphi 0, %s112
      %s129 = sphi 0, %s113
      %s135 = sphi 0, %s137
      %s138 = sphi 0, %s135
      %s139 = sphi 0, %s138
      %s155 = sphi 0, %s139
      %s161 = sphi 0, %s163
      %s164 = sphi 0, %s161
      %s165 = sphi 0, %s164
      %s181 = sphi 0, %s165
    $region4: #{rwkv7_cmix_forward.1} parent=1 // loop_header_branch
      %17 = sbr.rel (%p15) target = $region8
    $region5: #{rwkv7_cmix_forward.1} parent=1 // loop_body
      %s19 = ssub.s32 %s14, 1
      %s20 = ssub.s32 %s14, 2
      %s27 = sadd.s32 1, %s22
      %p28 = scmp.ge.s32.totalorder %s27, 2
      %s29 = scalar_select %p28, 0, %s27
      %s30 = sadd.s32 1, %s21
      %s31 = scalar_select %p28, %s30, %s21
      %p32 = scmp.ge.s32.totalorder %s31, 2
      %s33 = scalar_select %p32, 0, %s31
      %s34 = ssub.s32 %s21, %s33
      %p35 = scmp.eq.s32.totalorder %s34, 0
      %s37 = sadd.s32 %s36, 1
      %s38 = scalar_select %p35, %s36, %s37
      %p41 = pneg %p35
      %p42 = scmp.eq.s32.totalorder %s14, 3
      %p43 = por %p41, %p42
      %p44 = scmp.ne.s32.totalorder %s36, %s39
      %p45 = scmp.eq.s32.totalorder %s14, 0
      %p46 = por %p44, %p45
      %p47 = scmp.ne.s32.totalorder %s36, %s39
      %p48 = scmp.eq.s32.totalorder %s19, 3
      %p49 = por %p47, %p48
      %p50 = scmp.ne.s32.totalorder %s39, %s40
      %p51 = scmp.eq.s32.totalorder %s19, 0
      %p52 = por %p50, %p51
      %p53 = scmp.ne.s32.totalorder %s39, %s40
      %p54 = scmp.eq.s32.totalorder %s20, 3
      %p55 = por %p53, %p54
      %p57 = scmp.ne.s32.totalorder %s40, %s56
      %p58 = scmp.eq.s32.totalorder %s20, 0
      %p59 = por %p57, %p58
      %s60 = ssub.s32 %s21, %s33
      %p61 = scmp.eq.s32.totalorder %s60, 0
      %s63 = sadd.s32 %s62, 1
      %s64 = scalar_select %p61, %s62, %s63
      %p67 = pneg %p61
      %p68 = scmp.eq.s32.totalorder %s14, 3
      %p69 = por %p67, %p68
      %p70 = scmp.ne.s32.totalorder %s62, %s65
      %p71 = scmp.eq.s32.totalorder %s14, 0
      %p72 = por %p70, %p71
      %p73 = scmp.ne.s32.totalorder %s62, %s65
      %p74 = scmp.eq.s32.totalorder %s19, 3
      %p75 = por %p73, %p74
      %p76 = scmp.ne.s32.totalorder %s65, %s66
      %p77 = scmp.eq.s32.totalorder %s19, 0
      %p78 = por %p76, %p77
      %p79 = scmp.ne.s32.totalorder %s65, %s66
      %p80 = scmp.eq.s32.totalorder %s20, 3
      %p81 = por %p79, %p80
      %p83 = scmp.ne.s32.totalorder %s66, %s82
      %p84 = scmp.eq.s32.totalorder %s20, 0
      %p85 = por %p83, %p84
      %s87 = sadd.s32 %s86, 1
      %p90 = scmp.eq.s32.totalorder %s14, 3
      %p91 = scmp.ne.s32.totalorder %s86, %s88
      %p92 = scmp.eq.s32.totalorder %s14, 0
      %p93 = por %p91, %p92
      %p94 = scmp.ne.s32.totalorder %s86, %s88
      %p95 = scmp.eq.s32.totalorder %s19, 3
      %p96 = por %p94, %p95
      %p97 = scmp.ne.s32.totalorder %s88, %s89
      %p98 = scmp.eq.s32.totalorder %s19, 0
      %p99 = por %p97, %p98
      %p100 = scmp.ne.s32.totalorder %s88, %s89
      %p101 = scmp.eq.s32.totalorder %s20, 3
      %p102 = por %p100, %p101
      %p104 = scmp.ne.s32.totalorder %s89, %s103
      %p105 = scmp.eq.s32.totalorder %s20, 0
      %p106 = por %p104, %p105
      %s107 = ssub.s32 %s22, %s29
      %p108 = scmp.eq.s32.totalorder %s107, 0
      %s110 = sadd.s32 %s109, 1
      %s111 = scalar_select %p108, %s109, %s110
      %p114 = pneg %p108
      %p115 = scmp.eq.s32.totalorder %s14, 3
      %p116 = por %p114, %p115
      %p117 = scmp.ne.s32.totalorder %s109, %s112
      %p118 = scmp.eq.s32.totalorder %s14, 0
      %p119 = por %p117, %p118
      %p120 = scmp.ne.s32.totalorder %s109, %s112
      %p121 = scmp.eq.s32.totalorder %s19, 3
      %p122 = por %p120, %p121
      %p123 = scmp.ne.s32.totalorder %s112, %s113
      %p124 = scmp.eq.s32.totalorder %s19, 0
      %p125 = por %p123, %p124
      %p126 = scmp.ne.s32.totalorder %s112, %s113
      %p127 = scmp.eq.s32.totalorder %s20, 3
      %p128 = por %p126, %p127
      %p130 = scmp.ne.s32.totalorder %s113, %s129
      %p131 = scmp.eq.s32.totalorder %s20, 0
      %p132 = por %p130, %p131
      %s133 = ssub.s32 %s22, %s29
      %p134 = scmp.eq.s32.totalorder %s133, 0
      %s136 = sadd.s32 %s135, 1
      %s137 = scalar_select %p134, %s135, %s136
      %p140 = pneg %p134
      %p141 = scmp.eq.s32.totalorder %s14, 3
      %p142 = por %p140, %p141
      %p143 = scmp.ne.s32.totalorder %s135, %s138
      %p144 = scmp.eq.s32.totalorder %s14, 0
      %p145 = por %p143, %p144
      %p146 = scmp.ne.s32.totalorder %s135, %s138
      %p147 = scmp.eq.s32.totalorder %s19, 3
      %p148 = por %p146, %p147
      %p149 = scmp.ne.s32.totalorder %s138, %s139
      %p150 = scmp.eq.s32.totalorder %s19, 0
      %p151 = por %p149, %p150
      %p152 = scmp.ne.s32.totalorder %s138, %s139
      %p153 = scmp.eq.s32.totalorder %s20, 3
      %p154 = por %p152, %p153
      %p156 = scmp.ne.s32.totalorder %s139, %s155
      %p157 = scmp.eq.s32.totalorder %s20, 0
      %p158 = por %p156, %p157
      %s159 = ssub.s32 %s21, %s33
      %p160 = scmp.eq.s32.totalorder %s159, 0
      %s162 = sadd.s32 %s161, 1
      %s163 = scalar_select %p160, %s161, %s162
      %p166 = pneg %p160
      %p167 = scmp.eq.s32.totalorder %s14, 3
      %p168 = por %p166, %p167
      %p169 = scmp.ne.s32.totalorder %s161, %s164
      %p170 = scmp.eq.s32.totalorder %s14, 0
      %p171 = por %p169, %p170
      %p172 = scmp.ne.s32.totalorder %s161, %s164
      %p173 = scmp.eq.s32.totalorder %s19, 3
      %p174 = por %p172, %p173
      %p175 = scmp.ne.s32.totalorder %s164, %s165
      %p176 = scmp.eq.s32.totalorder %s19, 0
      %p177 = por %p175, %p176
      %p178 = scmp.ne.s32.totalorder %s164, %s165
      %p179 = scmp.eq.s32.totalorder %s20, 3
      %p180 = por %p178, %p179
      %p182 = scmp.ne.s32.totalorder %s165, %s181
      %p183 = scmp.eq.s32.totalorder %s20, 0
      %p184 = por %p182, %p183
      %p185 = scmp.le.s32.totalorder 1, %s14
      %p186 = scmp.lt.s32.totalorder %s14, 5
      %p187 = pnand %p185, %p186
      %p188 = pneg %p187
      // Predicated region
      $region9: #{rwkv7_cmix_forward.1} parent=5 // pred_check
        _
      $region10: #{rwkv7_cmix_forward.1} parent=5 // pred_check_branch
        %190 = sbr.rel (%p187) target = $region12
      $region11: #{rwkv7_cmix_forward.1} parent=5 // pred_region
        %s191 = ssub.s32 %s14, 1
        // Predicated region
        $region13: #{rwkv7_cmix_forward.1} parent=11 // pred_check
          %p192 = pneg %p99
        $region14: #{rwkv7_cmix_forward.1} parent=11 // pred_check_branch
          %194 = sbr.rel (%p192) target = $region16
        $region15: #{rwkv7_cmix_forward.1} parent=11 // pred_region
          _
        $region16: #{rwkv7_cmix_forward.1} parent=11 // pred_fallthru
          _
      $region12: #{rwkv7_cmix_forward.1} parent=5 // pred_fallthru
        _
      %p195 = scmp.lt.s32.totalorder %s14, 4
      // Predicated region
      $region17: #{rwkv7_cmix_forward.1} parent=5 // pred_check
        %p196 = pneg %p195
      $region18: #{rwkv7_cmix_forward.1} parent=5 // pred_check_branch
        %198 = sbr.rel (%p196) target = $region20
      $region19: #{rwkv7_cmix_forward.1} parent=5 // pred_region
        // Predicated region
        $region21: #{rwkv7_cmix_forward.1} parent=19 // pred_check
          %p199 = pneg %p46
        $region22: #{rwkv7_cmix_forward.1} parent=19 // pred_check_branch
          %201 = sbr.rel (%p199) target = $region24
        $region23: #{rwkv7_cmix_forward.1} parent=19 // pred_region
          %p202 = scmp.lt.s32.totalorder %s21, 1
          %s203 = scalar_select %p202, %s21, 1
          %s204 = smul.addr %s203, 4
          %s205 = scalar_lea.vmem %s0, %s204
        $region24: #{rwkv7_cmix_forward.1} parent=19 // pred_fallthru
          _
        // Predicated region
        $region25: #{rwkv7_cmix_forward.1} parent=19 // pred_check
          %p206 = pneg %p72
        $region26: #{rwkv7_cmix_forward.1} parent=19 // pred_check_branch
          %208 = sbr.rel (%p206) target = $region28
        $region27: #{rwkv7_cmix_forward.1} parent=19 // pred_region
          %p209 = scmp.lt.s32.totalorder %s21, 1
          %s210 = scalar_select %p209, %s21, 1
          %s211 = smul.addr %s210, 4
          %s212 = scalar_lea.vmem %s1, %s211
        $region28: #{rwkv7_cmix_forward.1} parent=19 // pred_fallthru
          _
        // Predicated region
        $region29: #{rwkv7_cmix_forward.1} parent=19 // pred_check
          %p213 = pneg %p119
        $region30: #{rwkv7_cmix_forward.1} parent=19 // pred_check_branch
          %215 = sbr.rel (%p213) target = $region32
        $region31: #{rwkv7_cmix_forward.1} parent=19 // pred_region
          %s216 = sand.u32 %s109, 1
          %s217 = sand.u32 %s109, 1
          %s218 = smul.addr %s217, 32
          %s219 = scalar_lea.vmem [#allocation3], %s218
          %s220 = smul.addr %s22, 4
          %s221 = scalar_lea.vmem %s3, %s220
          // Predicated region
          $region33: #{rwkv7_cmix_forward.1} parent=31 // pred_check
            _
          $region34: #{rwkv7_cmix_forward.1} parent=31 // pred_check_branch
            %223 = sbr.rel (0) target = $region36
          $region35: #{rwkv7_cmix_forward.1} parent=31 // pred_region
            // Predicated region
            $region37: #{rwkv7_cmix_forward.1} parent=35 // pred_check
              _
            $region38: #{rwkv7_cmix_forward.1} parent=35 // pred_check_branch
              %225 = sbr.rel target = $region40
            $region39: #{rwkv7_cmix_forward.1} parent=35 // pred_region
              // Predicated region
              $region52: #{rwkv7_cmix_forward.1} parent=39 // pred_check
                _
              $region53: #{rwkv7_cmix_forward.1} parent=39 // pred_check_branch
                %254 = sbr.rel (0) target = $region55
              $region54: #{rwkv7_cmix_forward.1} parent=39 // pred_region
                loop: start=0, step=1, limit=1
                $region56: #{rwkv7_cmix_forward.1} parent=54 // loop_pre_header
                  _
                $region57: #{rwkv7_cmix_forward.1} parent=54 // loop_header
                  %s256 = sphi 0, %s260
                  %p257 = scmp.ge.s32.totalorder %s256, 1
                  %s261 = sphi %s221, %s221
                  %s262 = sphi %s219, %s219
                $region58: #{rwkv7_cmix_forward.1} parent=54 // loop_header_branch
                  %259 = sbr.rel (%p257) target = $region62
                $region59: #{rwkv7_cmix_forward.1} parent=54 // loop_body
                  _
                $region60: #{rwkv7_cmix_forward.1} parent=54 // loop_footer
                  %s260 = sadd.s32 1, %s256
                $region61: #{rwkv7_cmix_forward.1} parent=54 // loop_footer_branch
                  %255 = sbr.rel target = $region57
                $region62: #{rwkv7_cmix_forward.1} parent=54 // loop_exit
                  _
                loop: start=0, step=1, limit=1
                $region63: #{rwkv7_cmix_forward.1} parent=54 // loop_pre_header
                  _
                $region64: #{rwkv7_cmix_forward.1} parent=54 // loop_header
                  %s265 = sphi 0, %s269
                  %p266 = scmp.ge.s32.totalorder %s265, 1
                  %s270 = sphi %s221, %s221
                  %s271 = sphi %s219, %s219
                $region65: #{rwkv7_cmix_forward.1} parent=54 // loop_header_branch
                  %268 = sbr.rel (%p266) target = $region69
                $region66: #{rwkv7_cmix_forward.1} parent=54 // loop_body
                  %v272 = vld [vmem:[%s270] sm:$0xf]
                  %273 = vst [vmem:[%s271] sm:$0xf] %v272
                  %v274 = vld [vmem:[%s270 + $0x8] sm:$0xf]
                  %275 = vst [vmem:[%s271 + $0x4] sm:$0xf] %v274
                  %v276 = vld [vmem:[%s270 + $0x10] sm:$0xf]
                  %277 = vst [vmem:[%s271 + $0x8] sm:$0xf] %v276
                  %v278 = vld [vmem:[%s270 + $0x18] sm:$0xf]
                  %279 = vst [vmem:[%s271 + $0xc] sm:$0xf] %v278
                  %v280 = vld [vmem:[%s270 + $0x20] sm:$0xf]
                  %281 = vst [vmem:[%s271 + $0x10] sm:$0xf] %v280
                  %v282 = vld [vmem:[%s270 + $0x28] sm:$0xf]
                  %283 = vst [vmem:[%s271 + $0x14] sm:$0xf] %v282
                  %v284 = vld [vmem:[%s270 + $0x30] sm:$0xf]
                  %285 = vst [vmem:[%s271 + $0x18] sm:$0xf] %v284
                  %v286 = vld [vmem:[%s270 + $0x38] sm:$0xf]
                  %287 = vst [vmem:[%s271 + $0x1c] sm:$0xf] %v286
                $region67: #{rwkv7_cmix_forward.1} parent=54 // loop_footer
                  %s269 = sadd.s32 1, %s265
                $region68: #{rwkv7_cmix_forward.1} parent=54 // loop_footer_branch
                  %264 = sbr.rel target = $region64
                $region69: #{rwkv7_cmix_forward.1} parent=54 // loop_exit
                  _
              $region55: #{rwkv7_cmix_forward.1} parent=39 // pred_fallthru
                _
            $region40: #{rwkv7_cmix_forward.1} parent=35 // pred_fallthru
              _
            // Predicated region
            $region41: #{rwkv7_cmix_forward.1} parent=35 // pred_check
              _
            $region42: #{rwkv7_cmix_forward.1} parent=35 // pred_check_branch
              %227 = sbr.rel (0) target = $region44
            $region43: #{rwkv7_cmix_forward.1} parent=35 // pred_region
              loop: start=0, step=1, limit=1
              $region45: #{rwkv7_cmix_forward.1} parent=43 // loop_pre_header
                _
              $region46: #{rwkv7_cmix_forward.1} parent=43 // loop_header
                %s230 = sphi 0, %s234
                %p231 = scmp.ge.s32.totalorder %s230, 1
                %s235 = sphi %s221, %s221
                %s236 = sphi %s219, %s219
              $region47: #{rwkv7_cmix_forward.1} parent=43 // loop_header_branch
                %233 = sbr.rel (%p231) target = $region51
              $region48: #{rwkv7_cmix_forward.1} parent=43 // loop_body
                %v237 = vld [vmem:[%s235] sm:$0xf]
                %238 = vst [vmem:[%s236] sm:$0xf] %v237
                %v239 = vld [vmem:[%s235 + $0x8] sm:$0xf]
                %240 = vst [vmem:[%s236 + $0x4] sm:$0xf] %v239
                %v241 = vld [vmem:[%s235 + $0x10] sm:$0xf]
                %242 = vst [vmem:[%s236 + $0x8] sm:$0xf] %v241
                %v243 = vld [vmem:[%s235 + $0x18] sm:$0xf]
                %244 = vst [vmem:[%s236 + $0xc] sm:$0xf] %v243
                %v245 = vld [vmem:[%s235 + $0x20] sm:$0xf]
                %246 = vst [vmem:[%s236 + $0x10] sm:$0xf] %v245
                %v247 = vld [vmem:[%s235 + $0x28] sm:$0xf]
                %248 = vst [vmem:[%s236 + $0x14] sm:$0xf] %v247
                %v249 = vld [vmem:[%s235 + $0x30] sm:$0xf]
                %250 = vst [vmem:[%s236 + $0x18] sm:$0xf] %v249
                %v251 = vld [vmem:[%s235 + $0x38] sm:$0xf]
                %252 = vst [vmem:[%s236 + $0x1c] sm:$0xf] %v251
              $region49: #{rwkv7_cmix_forward.1} parent=43 // loop_footer
                %s234 = sadd.s32 1, %s230
              $region50: #{rwkv7_cmix_forward.1} parent=43 // loop_footer_branch
                %229 = sbr.rel target = $region46
              $region51: #{rwkv7_cmix_forward.1} parent=43 // loop_exit
                _
            $region44: #{rwkv7_cmix_forward.1} parent=35 // pred_fallthru
              _
          $region36: #{rwkv7_cmix_forward.1} parent=31 // pred_fallthru
            _
          %288 = vnop
        $region32: #{rwkv7_cmix_forward.1} parent=19 // pred_fallthru
          _
        // Predicated region
        $region70: #{rwkv7_cmix_forward.1} parent=19 // pred_check
          %p289 = pneg %p145
        $region71: #{rwkv7_cmix_forward.1} parent=19 // pred_check_branch
          %291 = sbr.rel (%p289) target = $region73
        $region72: #{rwkv7_cmix_forward.1} parent=19 // pred_region
          %s292 = smul.u32 16, %s22
          %p293 = scmp.lt.s32.totalorder %s292, 31
          %s294 = scalar_select %p293, %s292, 31
          %s295 = smul.addr %s294, 4
          %s296 = scalar_lea.vmem %s4, %s295
          %s297 = smul.u32 16, %s22
        $region73: #{rwkv7_cmix_forward.1} parent=19 // pred_fallthru
          _
      $region20: #{rwkv7_cmix_forward.1} parent=5 // pred_fallthru
        _
      %p298 = scmp.le.s32.totalorder 1, %s14
      %p299 = scmp.lt.s32.totalorder %s14, 5
      %p300 = pnand %p298, %p299
      %p301 = pneg %p300
      // Predicated region
      $region74: #{rwkv7_cmix_forward.1} parent=5 // pred_check
        _
      $region75: #{rwkv7_cmix_forward.1} parent=5 // pred_check_branch
        %303 = sbr.rel (%p300) target = $region77
      $region76: #{rwkv7_cmix_forward.1} parent=5 // pred_region
        %s304 = ssub.s32 %s14, 1
        %s305 = sand.u32 %s112, 1
        %s306 = sand.u32 %s112, 1
        %s307 = smul.addr %s306, 32
        %s308 = scalar_lea.vmem [#allocation3], %s307
        // Predicated region
        $region78: #{rwkv7_cmix_forward.1} parent=76 // pred_check
          %p309 = pneg %p125
        $region79: #{rwkv7_cmix_forward.1} parent=76 // pred_check_branch
          %311 = sbr.rel (%p309) target = $region81
        $region80: #{rwkv7_cmix_forward.1} parent=76 // pred_region
          _
        $region81: #{rwkv7_cmix_forward.1} parent=76 // pred_fallthru
          _
        %p312 = scmp.lt.s32.totalorder %s23, 1
        %s313 = scalar_select %p312, %s23, 1
        %s314 = smul.addr %s313, 4
        %s315 = scalar_lea.vmem %s0, %s314
        %p316 = pneg %p52
        %p317 = pneg %p49
        %p318 = scmp.lt.s32.totalorder %s23, 1
        %s319 = scalar_select %p318, %s23, 1
        %s320 = smul.addr %s319, 4
        %s321 = scalar_lea.vmem %s1, %s320
        %p322 = pneg %p78
        %p323 = pneg %p75
        %p324 = pneg %p99
        %p325 = pneg %p96
        %s326 = sand.u32 %s112, 1
        %s327 = sand.u32 %s112, 1
        %s328 = smul.addr %s327, 32
        %s329 = scalar_lea.vmem [#allocation3], %s328
        %p330 = pneg %p125
        %p331 = pneg %p122
        %s332 = smul.u32 16, %s24
        %p333 = scmp.lt.s32.totalorder %s332, 31
        %s334 = scalar_select %p333, %s332, 31
        %s335 = smul.addr %s334, 4
        %s336 = scalar_lea.vmem %s4, %s335
        %p337 = pneg %p151
        %p338 = pneg %p148
        %p339 = pneg %p177
        %p340 = pneg %p174
        %s341 = sand.u32 %s164, 1
        %s342 = scalar_lea.sflag [#allocation5], %s341
        %s343 = sand.u32 %s164, 1
        %s344 = smul.addr %s343, 8
        %s345 = scalar_lea.vmem [#allocation4], %s344
        %p346 = scmp.lt.s32.totalorder %s23, 1
        %s347 = scalar_select %p346, %s23, 1
        %s348 = smul.addr %s347, 4
        %s349 = scalar_lea.vmem %s0, %s348
        %p350 = scmp.lt.s32.totalorder %s23, 1
        %s351 = scalar_select %p350, %s23, 1
        %s352 = smul.addr %s351, 4
        %s353 = scalar_lea.vmem %s1, %s352
        %s354 = smul.u32 16, %s24
        %p355 = scmp.lt.s32.totalorder %s354, 31
        %s356 = scalar_select %p355, %s354, 31
        %s357 = smul.addr %s356, 4
        %s358 = scalar_lea.vmem %s4, %s357
        %s359 = smul.u32 16, %s24
        %p361 = scmp.eq.s32.totalorder %s24, 0
        // Predicated region
        $region82: #{rwkv7_cmix_forward.1} parent=76 // pred_check
          %p362 = pneg %p361
        $region83: #{rwkv7_cmix_forward.1} parent=76 // pred_check_branch
          %364 = sbr.rel (%p362) target = $region85
        $region84: #{rwkv7_cmix_forward.1} parent=76 // pred_region
          %vm365 = vcmask 523264
          %366 = vst.msk [vmem:[#allocation2] sm:$0xff] %vm365, 0.0
        $region85: #{rwkv7_cmix_forward.1} parent=76 // pred_fallthru
          _
        %v367 = vld [vmem:[%s349] sm:$0xf]
        %v368 = vunpack.c.l.bf16 %v367
        %v369 = vld [vmem:[%s353] sm:$0xf]
        %v370 = vunpack.c.l.bf16 %v369
        %v371 = vsub.f32 %v370, %v368
        %v372 = vld [vmem:[%s2] sm:$0x1]
        %v374 = vlaneseq
        %v375 = vshrl.u32 %v374, 7
        %v376 = vsub.s32 0, %v375
        %v377 = vrot.slane %v372, %v376
        %v379 = vmul.f32 %v371, %v377
        %v380 = vadd.f32 %v368, %v379
        %v381 = vpack.c.bf16 %v380, %v380
        %v382 = vld [vmem:[%s308] sm:$0xf]
        %v383 = vld [vmem:[%s308 + $0x4] sm:$0xf]
        %v384 = vld [vmem:[%s308 + $0x8] sm:$0xf]
        %v385 = vld [vmem:[%s308 + $0xc] sm:$0xf]
        %v386 = vld [vmem:[%s308 + $0x10] sm:$0xf]
        %v387 = vld [vmem:[%s308 + $0x14] sm:$0xf]
        %v388 = vld [vmem:[%s308 + $0x18] sm:$0xf]
        %v389 = vld [vmem:[%s308 + $0x1c] sm:$0xf]
        %v398 = vunpack.c.l.b16 %v382
        %v399 = vunpack.c.l.b16 %v383
        %v400 = vunpack.c.l.b16 %v384
        %v401 = vunpack.c.l.b16 %v385
        %v402 = vunpack.c.l.b16 %v386
        %v403 = vunpack.c.l.b16 %v387
        %v404 = vunpack.c.l.b16 %v388
        %v405 = vunpack.c.l.b16 %v389
        %v406 = vpack.c.b16 %v399, %v398
        %v407 = vpack.c.b16 %v401, %v400
        %v408 = vpack.c.b16 %v403, %v402
        %v409 = vpack.c.b16 %v405, %v404
        %vm414 = vcmask 523264
        %v416 = vsel %vm414, %v381, 0
        %418 = vmatprep.subr.bf16.mxu0 0
        %419 = vmatpush1.bf16.msra.mxu0 %v406
        %420 = vmatprep.subr.bf16.mxu0 0
        %421 = vmatpush1.bf16.msra.mxu0 %v407
        %422 = vmatprep.subr.bf16.mxu0 0
        %423 = vmatpush1.bf16.msra.mxu0 %v408
        %424 = vmatprep.subr.bf16.mxu0 0
        %425 = vmatpush1.bf16.msra.mxu0 %v409
        %426 = vmatprep.subr.bf16.mxu0 0
        %427 = vmatpush1.bf16.msra.mxu0 0
        %428 = vmatprep.subr.bf16.mxu0 0
        %429 = vmatpush1.bf16.msra.mxu0 0
        %430 = vmatprep.subr.bf16.mxu0 0
        %431 = vmatpush1.bf16.msra.mxu0 0
        %432 = vmatprep.subr.bf16.mxu0 0
        %433 = vmatpush1.bf16.msra.mxu0 0
        %434 = vmatprep.subr.bf16.mxu0 0
        %435 = vmatpush1.bf16.msra.mxu0 0
        %436 = vmatprep.subr.bf16.mxu0 0
        %437 = vmatpush1.bf16.msra.mxu0 0
        %438 = vmatprep.subr.bf16.mxu0 0
        %439 = vmatpush1.bf16.msra.mxu0 0
        %440 = vmatprep.subr.bf16.mxu0 0
        %441 = vmatpush1.bf16.msra.mxu0 0
        %442 = vmatprep.subr.bf16.mxu0 0
        %443 = vmatpush1.bf16.msra.mxu0 0
        %444 = vmatprep.subr.bf16.mxu0 0
        %445 = vmatpush1.bf16.msra.mxu0 0
        %446 = vmatprep.subr.bf16.mxu0 0
        %447 = vmatpush1.bf16.msra.mxu0 0
        %448 = vmatprep.subr.bf16.mxu0 0
        %449 = vmatpush1.bf16.msra.mxu0 0
        %450 = vmatprep.mubr.bf16.mxu0 0
        %451 = vmatmul.mubr.bf16.gmra.mrb[0].mxu0 %v416
        %v452 = vpop.f32.mrb[0].mxu0
        %v453 = vadd.f32 0.0, %v452
        %v454 = vpop.f32.mrb[0].mxu0
        %v455 = vpop.f32.mrb[0].mxu0
        %v456 = vpop.f32.mrb[0].mxu0
        %457 = vdwg.mxu0
        %v458 = vmax.f32 %v453, 0.0
        %v459 = vmul.f32 %v458, %v458
        %v460 = vld [vmem:[#allocation2] sm:$0xff]
        %v461 = vpack.c.bf16 %v459, %v459
        %v462 = vld [vmem:[%s358] sm:$0xf]
        %v463 = vld [vmem:[%s358 + $0x4] sm:$0xf]
        %v464 = vld [vmem:[%s358 + $0x8] sm:$0xf]
        %v465 = vld [vmem:[%s358 + $0xc] sm:$0xf]
        %v466 = vld [vmem:[%s358 + $0x10] sm:$0xf]
        %v467 = vld [vmem:[%s358 + $0x14] sm:$0xf]
        %v468 = vld [vmem:[%s358 + $0x18] sm:$0xf]
        %v469 = vld [vmem:[%s358 + $0x1c] sm:$0xf]
        %v470 = vld [vmem:[%s358 + $0x20] sm:$0xf]
        %v471 = vld [vmem:[%s358 + $0x24] sm:$0xf]
        %v472 = vld [vmem:[%s358 + $0x28] sm:$0xf]
        %v473 = vld [vmem:[%s358 + $0x2c] sm:$0xf]
        %v474 = vld [vmem:[%s358 + $0x30] sm:$0xf]
        %v475 = vld [vmem:[%s358 + $0x34] sm:$0xf]
        %v476 = vld [vmem:[%s358 + $0x38] sm:$0xf]
        %v477 = vld [vmem:[%s358 + $0x3c] sm:$0xf]
        %v494 = vunpack.c.l.b16 %v462
        %v495 = vunpack.c.l.b16 %v463
        %v496 = vunpack.c.l.b16 %v464
        %v497 = vunpack.c.l.b16 %v465
        %v498 = vunpack.c.l.b16 %v466
        %v499 = vunpack.c.l.b16 %v467
        %v500 = vunpack.c.l.b16 %v468
        %v501 = vunpack.c.l.b16 %v469
        %v502 = vunpack.c.l.b16 %v470
        %v503 = vunpack.c.l.b16 %v471
        %v504 = vunpack.c.l.b16 %v472
        %v505 = vunpack.c.l.b16 %v473
        %v506 = vunpack.c.l.b16 %v474
        %v507 = vunpack.c.l.b16 %v475
        %v508 = vunpack.c.l.b16 %v476
        %v509 = vunpack.c.l.b16 %v477
        %v510 = vpack.c.b16 %v495, %v494
        %v511 = vpack.c.b16 %v497, %v496
        %v512 = vpack.c.b16 %v499, %v498
        %v513 = vpack.c.b16 %v501, %v500
        %v514 = vpack.c.b16 %v503, %v502
        %v515 = vpack.c.b16 %v505, %v504
        %v516 = vpack.c.b16 %v507, %v506
        %v517 = vpack.c.b16 %v509, %v508
        %526 = vmatprep.subr.bf16.mxu0 0
        %527 = vmatpush1.bf16.msra.mxu0 %v510
        %528 = vmatprep.subr.bf16.mxu0 0
        %529 = vmatpush1.bf16.msra.mxu0 %v511
        %530 = vmatprep.subr.bf16.mxu0 0
        %531 = vmatpush1.bf16.msra.mxu0 %v512
        %532 = vmatprep.subr.bf16.mxu0 0
        %533 = vmatpush1.bf16.msra.mxu0 %v513
        %534 = vmatprep.subr.bf16.mxu0 0
        %535 = vmatpush1.bf16.msra.mxu0 %v514
        %536 = vmatprep.subr.bf16.mxu0 0
        %537 = vmatpush1.bf16.msra.mxu0 %v515
        %538 = vmatprep.subr.bf16.mxu0 0
        %539 = vmatpush1.bf16.msra.mxu0 %v516
        %540 = vmatprep.subr.bf16.mxu0 0
        %541 = vmatpush1.bf16.msra.mxu0 %v517
        %542 = vmatprep.subr.bf16.mxu0 0
        %543 = vmatpush1.bf16.msra.mxu0 0
        %544 = vmatprep.subr.bf16.mxu0 0
        %545 = vmatpush1.bf16.msra.mxu0 0
        %546 = vmatprep.subr.bf16.mxu0 0
        %547 = vmatpush1.bf16.msra.mxu0 0
        %548 = vmatprep.subr.bf16.mxu0 0
        %549 = vmatpush1.bf16.msra.mxu0 0
        %550 = vmatprep.subr.bf16.mxu0 0
        %551 = vmatpush1.bf16.msra.mxu0 0
        %552 = vmatprep.subr.bf16.mxu0 0
        %553 = vmatpush1.bf16.msra.mxu0 0
        %554 = vmatprep.subr.bf16.mxu0 0
        %555 = vmatpush1.bf16.msra.mxu0 0
        %556 = vmatprep.subr.bf16.mxu0 0
        %557 = vmatpush1.bf16.msra.mxu0 0
        %558 = vmatprep.mubr.bf16.mxu0 0
        %559 = vmatmul.mubr.bf16.gmra.mrb[0].mxu0 %v461
        %v560 = vpop.f32.mrb[0].mxu0
        %v561 = vadd.f32 0.0, %v560
        %v562 = vpop.f32.mrb[0].mxu0
        %v563 = vpop.f32.mrb[0].mxu0
        %v564 = vpop.f32.mrb[0].mxu0
        %565 = vdwg.mxu0
        %v566 = vadd.f32 %v460, %v561
        %567 = vst.msk [vmem:[#allocation2] sm:$0xff] %vm414, %v566
        %p568 = scmp.eq.s32.totalorder %s24, 1
        // Predicated region
        $region86: #{rwkv7_cmix_forward.1} parent=76 // pred_check
          %p569 = pneg %p568
        $region87: #{rwkv7_cmix_forward.1} parent=76 // pred_check_branch
          %571 = sbr.rel (%p569) target = $region89
        $region88: #{rwkv7_cmix_forward.1} parent=76 // pred_region
          %v572 = vld [vmem:[#allocation2] sm:$0xff]
          %573 = vst.msk [vmem:[%s345] sm:$0xff] %vm414, %v572
        $region89: #{rwkv7_cmix_forward.1} parent=76 // pred_fallthru
          _
        %s574 = sand.u32 %s164, 1
        %s575 = scalar_lea.sflag [#allocation5], %s574
        %s576 = sand.u32 %s164, 1
        %s577 = smul.addr %s576, 8
        %s578 = scalar_lea.vmem [#allocation4], %s577
        // Predicated region
        $region90: #{rwkv7_cmix_forward.1} parent=76 // pred_check
          %p579 = pneg %p174
        $region91: #{rwkv7_cmix_forward.1} parent=76 // pred_check_branch
          %581 = sbr.rel (%p579) target = $region93
        $region92: #{rwkv7_cmix_forward.1} parent=76 // pred_region
          %s583 = ssub.s32 128, 128
          %584 = vsyncadd %s575, %s583
          %s585 = smul.addr %s23, 128
          %s586 = scalar_lea.hbm %s5, %s585
          %s588 = sshll.u32 %s578, 4
          %s589 = int_to_ptr.vmem [resolvable:$true] %s588
          %591 = dma.vmem_to_hbm [thread:$0]  %s589, 128, %s586, %s575
        $region93: #{rwkv7_cmix_forward.1} parent=76 // pred_fallthru
          _
      $region77: #{rwkv7_cmix_forward.1} parent=5 // pred_fallthru
        _
      %p592 = scmp.le.s32.totalorder 2, %s14
      // Predicated region
      $region94: #{rwkv7_cmix_forward.1} parent=5 // pred_check
        %p593 = pneg %p592
      $region95: #{rwkv7_cmix_forward.1} parent=5 // pred_check_branch
        %595 = sbr.rel (%p593) target = $region97
      $region96: #{rwkv7_cmix_forward.1} parent=5 // pred_region
        %s596 = ssub.s32 %s14, 2
        // Predicated region
        $region98: #{rwkv7_cmix_forward.1} parent=96 // pred_check
          %p597 = pneg %p180
        $region99: #{rwkv7_cmix_forward.1} parent=96 // pred_check_branch
          %599 = sbr.rel (%p597) target = $region101
        $region100: #{rwkv7_cmix_forward.1} parent=96 // pred_region
          %s600 = sand.u32 %s165, 1
          %s601 = scalar_lea.sflag [#allocation5], %s600
          %s602 = sand.u32 %s165, 1
          %s603 = smul.addr %s602, 8
          %s604 = scalar_lea.vmem [#allocation4], %s603
          %605 = dma.done %s601, 128
        $region101: #{rwkv7_cmix_forward.1} parent=96 // pred_fallthru
          _
      $region97: #{rwkv7_cmix_forward.1} parent=5 // pred_fallthru
        _
    $region6: #{rwkv7_cmix_forward.1} parent=1 // loop_footer
      %s18 = sadd.s32 1, %s14
    $region7: #{rwkv7_cmix_forward.1} parent=1 // loop_footer_branch
      %13 = sbr.rel target = $region3
    $region8: #{rwkv7_cmix_forward.1} parent=1 // loop_exit
      _
    %606 = vsyncpa [#allocation5], 1
    %s607 = scalar_lea.sflag [#allocation5], 1
    %608 = vsyncpa %s607, 1

</llo_original>
